<compile_context>
chip_gen: v7x
topology: tpu7x:2x2x1
jax: 0.10.0
libtpu: 0.0.40
codegen_flags: <defaults>
</compile_context>

<pallas_src>
import numpy as np
import jax
import jax.numpy as jnp
from jax import lax
from jax.experimental import pallas as pl
from jax.experimental.pallas import tpu as pltpu

EPS = 1e-5
K_SIZES = (9, 5, 3)


# ------------------------------- kernel helpers ----------------------------- #
def _im2col(h, k):
    """h: (N, L, C) -> (N*L, K*C) 'same'-padded im2col (stride 1, odd K)."""
    n, l, c = h.shape
    p = (k - 1) // 2
    zpad = jnp.zeros((n, p, c), dtype=h.dtype)
    hp = jnp.concatenate([zpad, h, zpad], axis=1)              # (N, L+2p, C)
    cols = [hp[:, kk:kk + l, :] for kk in range(k)]            # K x (N, L, C)
    return jnp.concatenate(cols, axis=-1).reshape(n * l, k * c)


def _bn(y, gamma, beta):
    """Train-mode BatchNorm1d: per-channel (lane) stats over all rows, biased var."""
    mean = jnp.mean(y, axis=0, keepdims=True)
    d = y - mean
    var = jnp.mean(d * d, axis=0, keepdims=True)
    return gamma * (d * lax.rsqrt(var + EPS)) + beta


# --------------------------------- Pallas kernel ---------------------------- #
def resnet_block_kernel(x_ref,
                        wf_ref, bf_ref, gf_ref, betf_ref,
                        w2_ref, b2_ref, g2_ref, bet2_ref,
                        w3_ref, b3_ref, g3_ref, bet3_ref,
                        o_ref):
    n, l, _ = x_ref.shape
    c_out = w2_ref.shape[1]

    def conv_bn(h_nlc_bf16, w_ref, b_ref, g_ref, be_ref, k):
        cols = _im2col(h_nlc_bf16, k)                                  # (N*L, K*C) bf16
        y = jnp.dot(cols, w_ref[...], preferred_element_type=jnp.float32)
        y = y + b_ref[...]                                             # (1, C') broadcast
        return _bn(y, g_ref[...], be_ref[...])                         # f32

    # fused conv1 (K=9) + 1x1 skip: one matmul on shared im2col(x), split columns.
    x = x_ref[...].astype(jnp.bfloat16)
    y = conv_bn(x, wf_ref, bf_ref, gf_ref, betf_ref, K_SIZES[0])       # (N*L, 2*C_out)
    s = y[:, c_out:]                                                   # skip branch (no ReLU)
    h = jnp.maximum(y[:, :c_out], 0.0)                                 # residual branch 1

    for w_ref, b_ref, g_ref, be_ref, k in (
            (w2_ref, b2_ref, g2_ref, bet2_ref, K_SIZES[1]),
            (w3_ref, b3_ref, g3_ref, bet3_ref, K_SIZES[2])):
        h = conv_bn(h.astype(jnp.bfloat16).reshape(n, l, c_out),
                    w_ref, b_ref, g_ref, be_ref, k)
        h = jnp.maximum(h, 0.0)

    o_ref[...] = h + s                                                 # (N*L, C_out)


# ------------------------------- plain-JAX glue ------------------------------ #
def conv_w_to_im2col(w):
    """Conv1d weight (C_out, C_in, K) -> (K*C_in, C_out), matching _im2col order."""
    w = np.asarray(w, np.float32)
    c_out = w.shape[0]
    return np.transpose(w, (2, 1, 0)).reshape(-1, c_out)


def fused_first_weight(w1, ws):
    """Concatenate conv1 (K) and skip 1x1 weight columns into one (K*C_in, 2*C_out)."""
    w1 = np.asarray(w1, np.float32)
    ws = np.asarray(ws, np.float32)
    c_out, c_in, k1 = w1.shape
    p = (k1 - 1) // 2
    wf = np.zeros((k1 * c_in, 2 * c_out), np.float32)
    wf[:, :c_out] = conv_w_to_im2col(w1)
    wf[p * c_in:(p + 1) * c_in, c_out:] = ws[:, :, 0].T       # skip uses the center tap
    return wf


def make_params(key, in_channels, out_channels):
    """Deterministic parameters; shapes follow ResNetBlock.__init__."""
    chans = [in_channels, out_channels, out_channels, out_channels]
    specs = list(zip(chans[:-1], chans[1:], K_SIZES)) + [(in_channels, out_channels, 1)]
    keys = jax.random.split(key, 4 * len(specs))
    params, ki = [], 0
    for (cin, cout, ks) in specs:
        w = 0.1 * jax.random.normal(keys[ki], (cout, cin, ks), jnp.float32); ki += 1
        b = 0.1 * jax.random.normal(keys[ki], (cout,), jnp.float32); ki += 1
        gamma = 1.0 + 0.1 * jax.random.normal(keys[ki], (cout,), jnp.float32); ki += 1
        beta = 0.1 * jax.random.normal(keys[ki], (cout,), jnp.float32); ki += 1
        params.append((w, b, gamma, beta))
    return params


def pack_kernel_inputs(params):
    (w1, b1, g1, be1), p2, p3, (ws, bs, gs, bes) = params
    flat = [jnp.asarray(fused_first_weight(w1, ws), jnp.bfloat16),
            jnp.concatenate([b1, bs])[None, :],
            jnp.concatenate([g1, gs])[None, :],
            jnp.concatenate([be1, bes])[None, :]]
    for (w, b, g, be) in (p2, p3):
        flat += [jnp.asarray(conv_w_to_im2col(w), jnp.bfloat16),
                 b[None, :], g[None, :], be[None, :]]
    return flat


def resnet_block_forward(x, params):
    n, _, l = x.shape
    c_out = params[0][0].shape[0]
    x_t = jnp.transpose(x, (0, 2, 1))                        # (N, L, C_in): channels on lanes
    inputs = [x_t] + pack_kernel_inputs(params)
    out = pl.pallas_call(
        resnet_block_kernel,
        out_shape=jax.ShapeDtypeStruct((n * l, c_out), jnp.float32),
        in_specs=[pl.BlockSpec(memory_space=pltpu.MemorySpace.VMEM)] * len(inputs),
        out_specs=pl.BlockSpec(memory_space=pltpu.MemorySpace.VMEM),
    )(*inputs)
    # wrapper-side layout plumbing back to PyTorch NCL
    return jnp.transpose(out.reshape(n, l, c_out), (0, 2, 1))


# ------------------------------ pure-JAX reference --------------------------- #
def reference_forward(x, params):
    # Operands cast to bf16 at the conv boundary (same numerics contract as the
    # kernel's bf16 MXU matmuls); BN/ReLU in f32.
    def conv(h, w, b):
        k = w.shape[2]
        p = (k - 1) // 2
        y = lax.conv_general_dilated(
            h.astype(jnp.bfloat16), w.astype(jnp.bfloat16),
            window_strides=(1,), padding=[(p, p)],
            dimension_numbers=('NCH', 'OIH', 'NCH'),
            preferred_element_type=jnp.float32)
        return y + b[None, :, None]

    def bn(y, gamma, beta):
        mean = y.mean(axis=(0, 2), keepdims=True)
        var = ((y - mean) ** 2).mean(axis=(0, 2), keepdims=True)
        yn = (y - mean) / jnp.sqrt(var + EPS)
        return gamma[None, :, None] * yn + beta[None, :, None]

    h = x
    for (w, b, g, be) in params[:3]:
        h = jax.nn.relu(bn(conv(h, w, b), g, be))
    w, b, g, be = params[3]
    s = bn(conv(x, w, b), g, be)
    return h + s


if __name__ == "__main__":
    N, C_IN, C_OUT, L = 4, 4, 8, 16
    key = jax.random.PRNGKey(0)
    k_x, k_p = jax.random.split(key)
    x = jax.random.normal(k_x, (N, C_IN, L), jnp.float32)
    params = make_params(k_p, C_IN, C_OUT)

    out = jax.block_until_ready(resnet_block_forward(x, params))
    ref = jax.block_until_ready(reference_forward(x, params))
    assert out.shape == (N, C_OUT, L)
    np.testing.assert_allclose(np.asarray(out), np.asarray(ref), rtol=1e-2, atol=1e-2)
    print("KERNEL_OK")
</pallas_src>

<mosaic_0001>
module attributes {stable_mosaic.version = 11 : i64} {
  func.func @resnet_block_kernel(%arg0: memref<4x16x4xf32, #tpu.memory_space<vmem>>, %arg1: memref<36x16xbf16, #tpu.memory_space<vmem>>, %arg2: memref<1x16xf32, #tpu.memory_space<vmem>>, %arg3: memref<1x16xf32, #tpu.memory_space<vmem>>, %arg4: memref<1x16xf32, #tpu.memory_space<vmem>>, %arg5: memref<40x8xbf16, #tpu.memory_space<vmem>>, %arg6: memref<1x8xf32, #tpu.memory_space<vmem>>, %arg7: memref<1x8xf32, #tpu.memory_space<vmem>>, %arg8: memref<1x8xf32, #tpu.memory_space<vmem>>, %arg9: memref<24x8xbf16, #tpu.memory_space<vmem>>, %arg10: memref<1x8xf32, #tpu.memory_space<vmem>>, %arg11: memref<1x8xf32, #tpu.memory_space<vmem>>, %arg12: memref<1x8xf32, #tpu.memory_space<vmem>>, %arg13: memref<64x8xf32, #tpu.memory_space<vmem>>) attributes {dimension_semantics = [], scalar_prefetch = 0 : i64, scratch_operands = 0 : i64, tpu.core_type = #tpu.core_type<tc>} {
    %c0 = arith.constant 0 : index
    %c0_0 = arith.constant 0 : index
    %c0_1 = arith.constant 0 : index
    %0 = vector.load %arg0[%c0, %c0_0, %c0_1] : memref<4x16x4xf32, #tpu.memory_space<vmem>>, vector<4x16x4xf32>
    %1 = arith.truncf %0 : vector<4x16x4xf32> to vector<4x16x4xbf16>
    %cst = arith.constant 0.000000e+00 : bf16
    %2 = vector.broadcast %cst : bf16 to vector<4x4x4xbf16>
    %3 = tpu.concatenate %2, %1, %2 in 1 : vector<4x4x4xbf16>, vector<4x16x4xbf16>, vector<4x4x4xbf16> -> vector<4x24x4xbf16>
    %4 = vector.extract_strided_slice %3 {offsets = [0, 0, 0], sizes = [4, 16, 4], strides = [1, 1, 1]} : vector<4x24x4xbf16> to vector<4x16x4xbf16>
    %5 = vector.extract_strided_slice %3 {offsets = [0, 1, 0], sizes = [4, 16, 4], strides = [1, 1, 1]} : vector<4x24x4xbf16> to vector<4x16x4xbf16>
    %6 = vector.extract_strided_slice %3 {offsets = [0, 2, 0], sizes = [4, 16, 4], strides = [1, 1, 1]} : vector<4x24x4xbf16> to vector<4x16x4xbf16>
    %7 = vector.extract_strided_slice %3 {offsets = [0, 3, 0], sizes = [4, 16, 4], strides = [1, 1, 1]} : vector<4x24x4xbf16> to vector<4x16x4xbf16>
    %8 = vector.extract_strided_slice %3 {offsets = [0, 4, 0], sizes = [4, 16, 4], strides = [1, 1, 1]} : vector<4x24x4xbf16> to vector<4x16x4xbf16>
    %9 = vector.extract_strided_slice %3 {offsets = [0, 5, 0], sizes = [4, 16, 4], strides = [1, 1, 1]} : vector<4x24x4xbf16> to vector<4x16x4xbf16>
    %10 = vector.extract_strided_slice %3 {offsets = [0, 6, 0], sizes = [4, 16, 4], strides = [1, 1, 1]} : vector<4x24x4xbf16> to vector<4x16x4xbf16>
    %11 = vector.extract_strided_slice %3 {offsets = [0, 7, 0], sizes = [4, 16, 4], strides = [1, 1, 1]} : vector<4x24x4xbf16> to vector<4x16x4xbf16>
    %12 = vector.extract_strided_slice %3 {offsets = [0, 8, 0], sizes = [4, 16, 4], strides = [1, 1, 1]} : vector<4x24x4xbf16> to vector<4x16x4xbf16>
    %13 = tpu.concatenate %4, %5, %6, %7, %8, %9, %10, %11, %12 in 2 : vector<4x16x4xbf16>, vector<4x16x4xbf16>, vector<4x16x4xbf16>, vector<4x16x4xbf16>, vector<4x16x4xbf16>, vector<4x16x4xbf16>, vector<4x16x4xbf16>, vector<4x16x4xbf16>, vector<4x16x4xbf16> -> vector<4x16x36xbf16>
    %14 = vector.shape_cast %13 : vector<4x16x36xbf16> to vector<64x36xbf16>
    %c0_2 = arith.constant 0 : index
    %c0_3 = arith.constant 0 : index
    %15 = vector.load %arg1[%c0_2, %c0_3] : memref<36x16xbf16, #tpu.memory_space<vmem>>, vector<36x16xbf16>
    %cst_4 = arith.constant dense<0.000000e+00> : vector<64x16xf32>
    %16 = tpu.matmul %14, %15, %cst_4 {dimension_numbers = #tpu.dot_dimension_numbers<[1], [0], [0], [1], [0, 0, 1, 1], [], []>} : vector<64x36xbf16>, vector<36x16xbf16>, vector<64x16xf32> -> vector<64x16xf32>
    %c0_5 = arith.constant 0 : index
    %c0_6 = arith.constant 0 : index
    %17 = vector.load %arg2[%c0_5, %c0_6] : memref<1x16xf32, #tpu.memory_space<vmem>>, vector<1x16xf32>
    %18 = vector.broadcast %17 : vector<1x16xf32> to vector<64x16xf32>
    %19 = arith.addf %16, %18 : vector<64x16xf32>
    %c0_7 = arith.constant 0 : index
    %c0_8 = arith.constant 0 : index
    %20 = vector.load %arg3[%c0_7, %c0_8] : memref<1x16xf32, #tpu.memory_space<vmem>>, vector<1x16xf32>
    %c0_9 = arith.constant 0 : index
    %c0_10 = arith.constant 0 : index
    %21 = vector.load %arg4[%c0_9, %c0_10] : memref<1x16xf32, #tpu.memory_space<vmem>>, vector<1x16xf32>
    %cst_11 = arith.constant dense<0.000000e+00> : vector<16xf32>
    %22 = vector.multi_reduction <add>, %19, %cst_11 [0] : vector<64x16xf32> to vector<16xf32>
    %23 = vector.shape_cast %22 : vector<16xf32> to vector<1x16xf32>
    %cst_12 = arith.constant 6.400000e+01 : f32
    %24 = vector.broadcast %cst_12 : f32 to vector<1x16xf32>
    %25 = arith.divf %23, %24 : vector<1x16xf32>
    %26 = vector.broadcast %25 : vector<1x16xf32> to vector<64x16xf32>
    %27 = arith.subf %19, %26 : vector<64x16xf32>
    %28 = arith.mulf %27, %27 : vector<64x16xf32>
    %cst_13 = arith.constant dense<0.000000e+00> : vector<16xf32>
    %29 = vector.multi_reduction <add>, %28, %cst_13 [0] : vector<64x16xf32> to vector<16xf32>
    %30 = vector.shape_cast %29 : vector<16xf32> to vector<1x16xf32>
    %cst_14 = arith.constant 6.400000e+01 : f32
    %31 = vector.broadcast %cst_14 : f32 to vector<1x16xf32>
    %32 = arith.divf %30, %31 : vector<1x16xf32>
    %cst_15 = arith.constant 9.99999974E-6 : f32
    %33 = vector.broadcast %cst_15 : f32 to vector<1x16xf32>
    %34 = arith.addf %32, %33 : vector<1x16xf32>
    %35 = math.rsqrt %34 : vector<1x16xf32>
    %36 = vector.broadcast %35 : vector<1x16xf32> to vector<64x16xf32>
    %37 = arith.mulf %27, %36 : vector<64x16xf32>
    %38 = vector.broadcast %20 : vector<1x16xf32> to vector<64x16xf32>
    %39 = arith.mulf %38, %37 : vector<64x16xf32>
    %40 = vector.broadcast %21 : vector<1x16xf32> to vector<64x16xf32>
    %41 = arith.addf %39, %40 : vector<64x16xf32>
    %42 = vector.extract_strided_slice %41 {offsets = [0, 8], sizes = [64, 8], strides = [1, 1]} : vector<64x16xf32> to vector<64x8xf32>
    %43 = vector.extract_strided_slice %41 {offsets = [0, 0], sizes = [64, 8], strides = [1, 1]} : vector<64x16xf32> to vector<64x8xf32>
    %cst_16 = arith.constant 0.000000e+00 : f32
    %44 = vector.broadcast %cst_16 : f32 to vector<64x8xf32>
    %45 = arith.maximumf %43, %44 : vector<64x8xf32>
    %46 = arith.truncf %45 : vector<64x8xf32> to vector<64x8xbf16>
    %47 = vector.shape_cast %46 : vector<64x8xbf16> to vector<4x16x8xbf16>
    %cst_17 = arith.constant 0.000000e+00 : bf16
    %48 = vector.broadcast %cst_17 : bf16 to vector<4x2x8xbf16>
    %49 = tpu.concatenate %48, %47, %48 in 1 : vector<4x2x8xbf16>, vector<4x16x8xbf16>, vector<4x2x8xbf16> -> vector<4x20x8xbf16>
    %50 = vector.extract_strided_slice %49 {offsets = [0, 0, 0], sizes = [4, 16, 8], strides = [1, 1, 1]} : vector<4x20x8xbf16> to vector<4x16x8xbf16>
    %51 = vector.extract_strided_slice %49 {offsets = [0, 1, 0], sizes = [4, 16, 8], strides = [1, 1, 1]} : vector<4x20x8xbf16> to vector<4x16x8xbf16>
    %52 = vector.extract_strided_slice %49 {offsets = [0, 2, 0], sizes = [4, 16, 8], strides = [1, 1, 1]} : vector<4x20x8xbf16> to vector<4x16x8xbf16>
    %53 = vector.extract_strided_slice %49 {offsets = [0, 3, 0], sizes = [4, 16, 8], strides = [1, 1, 1]} : vector<4x20x8xbf16> to vector<4x16x8xbf16>
    %54 = vector.extract_strided_slice %49 {offsets = [0, 4, 0], sizes = [4, 16, 8], strides = [1, 1, 1]} : vector<4x20x8xbf16> to vector<4x16x8xbf16>
    %55 = tpu.concatenate %50, %51, %52, %53, %54 in 2 : vector<4x16x8xbf16>, vector<4x16x8xbf16>, vector<4x16x8xbf16>, vector<4x16x8xbf16>, vector<4x16x8xbf16> -> vector<4x16x40xbf16>
    %56 = vector.shape_cast %55 : vector<4x16x40xbf16> to vector<64x40xbf16>
    %c0_18 = arith.constant 0 : index
    %c0_19 = arith.constant 0 : index
    %57 = vector.load %arg5[%c0_18, %c0_19] : memref<40x8xbf16, #tpu.memory_space<vmem>>, vector<40x8xbf16>
    %cst_20 = arith.constant dense<0.000000e+00> : vector<64x8xf32>
    %58 = tpu.matmul %56, %57, %cst_20 {dimension_numbers = #tpu.dot_dimension_numbers<[1], [0], [0], [1], [0, 0, 1, 1], [], []>} : vector<64x40xbf16>, vector<40x8xbf16>, vector<64x8xf32> -> vector<64x8xf32>
    %c0_21 = arith.constant 0 : index
    %c0_22 = arith.constant 0 : index
    %59 = vector.load %arg6[%c0_21, %c0_22] : memref<1x8xf32, #tpu.memory_space<vmem>>, vector<1x8xf32>
    %60 = vector.broadcast %59 : vector<1x8xf32> to vector<64x8xf32>
    %61 = arith.addf %58, %60 : vector<64x8xf32>
    %c0_23 = arith.constant 0 : index
    %c0_24 = arith.constant 0 : index
    %62 = vector.load %arg7[%c0_23, %c0_24] : memref<1x8xf32, #tpu.memory_space<vmem>>, vector<1x8xf32>
    %c0_25 = arith.constant 0 : index
    %c0_26 = arith.constant 0 : index
    %63 = vector.load %arg8[%c0_25, %c0_26] : memref<1x8xf32, #tpu.memory_space<vmem>>, vector<1x8xf32>
    %cst_27 = arith.constant dense<0.000000e+00> : vector<8xf32>
    %64 = vector.multi_reduction <add>, %61, %cst_27 [0] : vector<64x8xf32> to vector<8xf32>
    %65 = vector.shape_cast %64 : vector<8xf32> to vector<1x8xf32>
    %cst_28 = arith.constant 6.400000e+01 : f32
    %66 = vector.broadcast %cst_28 : f32 to vector<1x8xf32>
    %67 = arith.divf %65, %66 : vector<1x8xf32>
    %68 = vector.broadcast %67 : vector<1x8xf32> to vector<64x8xf32>
    %69 = arith.subf %61, %68 : vector<64x8xf32>
    %70 = arith.mulf %69, %69 : vector<64x8xf32>
    %cst_29 = arith.constant dense<0.000000e+00> : vector<8xf32>
    %71 = vector.multi_reduction <add>, %70, %cst_29 [0] : vector<64x8xf32> to vector<8xf32>
    %72 = vector.shape_cast %71 : vector<8xf32> to vector<1x8xf32>
    %cst_30 = arith.constant 6.400000e+01 : f32
    %73 = vector.broadcast %cst_30 : f32 to vector<1x8xf32>
    %74 = arith.divf %72, %73 : vector<1x8xf32>
    %cst_31 = arith.constant 9.99999974E-6 : f32
    %75 = vector.broadcast %cst_31 : f32 to vector<1x8xf32>
    %76 = arith.addf %74, %75 : vector<1x8xf32>
    %77 = math.rsqrt %76 : vector<1x8xf32>
    %78 = vector.broadcast %77 : vector<1x8xf32> to vector<64x8xf32>
    %79 = arith.mulf %69, %78 : vector<64x8xf32>
    %80 = vector.broadcast %62 : vector<1x8xf32> to vector<64x8xf32>
    %81 = arith.mulf %80, %79 : vector<64x8xf32>
    %82 = vector.broadcast %63 : vector<1x8xf32> to vector<64x8xf32>
    %83 = arith.addf %81, %82 : vector<64x8xf32>
    %cst_32 = arith.constant 0.000000e+00 : f32
    %84 = vector.broadcast %cst_32 : f32 to vector<64x8xf32>
    %85 = arith.maximumf %83, %84 : vector<64x8xf32>
    %86 = arith.truncf %85 : vector<64x8xf32> to vector<64x8xbf16>
    %87 = vector.shape_cast %86 : vector<64x8xbf16> to vector<4x16x8xbf16>
    %cst_33 = arith.constant 0.000000e+00 : bf16
    %88 = vector.broadcast %cst_33 : bf16 to vector<4x1x8xbf16>
    %89 = tpu.concatenate %88, %87, %88 in 1 : vector<4x1x8xbf16>, vector<4x16x8xbf16>, vector<4x1x8xbf16> -> vector<4x18x8xbf16>
    %90 = vector.extract_strided_slice %89 {offsets = [0, 0, 0], sizes = [4, 16, 8], strides = [1, 1, 1]} : vector<4x18x8xbf16> to vector<4x16x8xbf16>
    %91 = vector.extract_strided_slice %89 {offsets = [0, 1, 0], sizes = [4, 16, 8], strides = [1, 1, 1]} : vector<4x18x8xbf16> to vector<4x16x8xbf16>
    %92 = vector.extract_strided_slice %89 {offsets = [0, 2, 0], sizes = [4, 16, 8], strides = [1, 1, 1]} : vector<4x18x8xbf16> to vector<4x16x8xbf16>
    %93 = tpu.concatenate %90, %91, %92 in 2 : vector<4x16x8xbf16>, vector<4x16x8xbf16>, vector<4x16x8xbf16> -> vector<4x16x24xbf16>
    %94 = vector.shape_cast %93 : vector<4x16x24xbf16> to vector<64x24xbf16>
    %c0_34 = arith.constant 0 : index
    %c0_35 = arith.constant 0 : index
    %95 = vector.load %arg9[%c0_34, %c0_35] : memref<24x8xbf16, #tpu.memory_space<vmem>>, vector<24x8xbf16>
    %cst_36 = arith.constant dense<0.000000e+00> : vector<64x8xf32>
    %96 = tpu.matmul %94, %95, %cst_36 {dimension_numbers = #tpu.dot_dimension_numbers<[1], [0], [0], [1], [0, 0, 1, 1], [], []>} : vector<64x24xbf16>, vector<24x8xbf16>, vector<64x8xf32> -> vector<64x8xf32>
    %c0_37 = arith.constant 0 : index
    %c0_38 = arith.constant 0 : index
    %97 = vector.load %arg10[%c0_37, %c0_38] : memref<1x8xf32, #tpu.memory_space<vmem>>, vector<1x8xf32>
    %98 = vector.broadcast %97 : vector<1x8xf32> to vector<64x8xf32>
    %99 = arith.addf %96, %98 : vector<64x8xf32>
    %c0_39 = arith.constant 0 : index
    %c0_40 = arith.constant 0 : index
    %100 = vector.load %arg11[%c0_39, %c0_40] : memref<1x8xf32, #tpu.memory_space<vmem>>, vector<1x8xf32>
    %c0_41 = arith.constant 0 : index
    %c0_42 = arith.constant 0 : index
    %101 = vector.load %arg12[%c0_41, %c0_42] : memref<1x8xf32, #tpu.memory_space<vmem>>, vector<1x8xf32>
    %cst_43 = arith.constant dense<0.000000e+00> : vector<8xf32>
    %102 = vector.multi_reduction <add>, %99, %cst_43 [0] : vector<64x8xf32> to vector<8xf32>
    %103 = vector.shape_cast %102 : vector<8xf32> to vector<1x8xf32>
    %cst_44 = arith.constant 6.400000e+01 : f32
    %104 = vector.broadcast %cst_44 : f32 to vector<1x8xf32>
    %105 = arith.divf %103, %104 : vector<1x8xf32>
    %106 = vector.broadcast %105 : vector<1x8xf32> to vector<64x8xf32>
    %107 = arith.subf %99, %106 : vector<64x8xf32>
    %108 = arith.mulf %107, %107 : vector<64x8xf32>
    %cst_45 = arith.constant dense<0.000000e+00> : vector<8xf32>
    %109 = vector.multi_reduction <add>, %108, %cst_45 [0] : vector<64x8xf32> to vector<8xf32>
    %110 = vector.shape_cast %109 : vector<8xf32> to vector<1x8xf32>
    %cst_46 = arith.constant 6.400000e+01 : f32
    %111 = vector.broadcast %cst_46 : f32 to vector<1x8xf32>
    %112 = arith.divf %110, %111 : vector<1x8xf32>
    %cst_47 = arith.constant 9.99999974E-6 : f32
    %113 = vector.broadcast %cst_47 : f32 to vector<1x8xf32>
    %114 = arith.addf %112, %113 : vector<1x8xf32>
    %115 = math.rsqrt %114 : vector<1x8xf32>
    %116 = vector.broadcast %115 : vector<1x8xf32> to vector<64x8xf32>
    %117 = arith.mulf %107, %116 : vector<64x8xf32>
    %118 = vector.broadcast %100 : vector<1x8xf32> to vector<64x8xf32>
    %119 = arith.mulf %118, %117 : vector<64x8xf32>
    %120 = vector.broadcast %101 : vector<1x8xf32> to vector<64x8xf32>
    %121 = arith.addf %119, %120 : vector<64x8xf32>
    %cst_48 = arith.constant 0.000000e+00 : f32
    %122 = vector.broadcast %cst_48 : f32 to vector<64x8xf32>
    %123 = arith.maximumf %121, %122 : vector<64x8xf32>
    %124 = arith.addf %123, %42 : vector<64x8xf32>
    %c0_49 = arith.constant 0 : index
    %c0_50 = arith.constant 0 : index
    %125 = vector.load %arg13[%c0_49, %c0_50] : memref<64x8xf32, #tpu.memory_space<vmem>>, vector<64x8xf32>
    tpu.vector_store %arg13[%c0_49, %c0_50], %124 {strides = array<i32>} : memref<64x8xf32, #tpu.memory_space<vmem>>, vector<64x8xf32>,
    return
  }
}

</mosaic_0001>

<llo_original>
// kernel: tpu_custom_call.1
$region0: #{tpu_custom_call.1}
  #allocation0 [shape = 'u32[]', space=smem, size = 0x4, offset = 0x4, fixed_abs, tag = 'smem constant byte address 0x4 - core index']
  #allocation1 [shape = 'u32[144,128]{1,0:T(1,128)}', space=vmem, size = 0x12000, scoped, tag = 'internal scratch']
  %s0 = inlined_call_operand.vmem [shape: f32[4,16,4], index: 0, kind: input, shape index: {}]
  %s1 = inlined_call_operand.vmem [shape: bf16[36,16], index: 1, kind: input, shape index: {}]
  %s2 = inlined_call_operand.vmem [shape: f32[1,16], index: 2, kind: input, shape index: {}]
  %s3 = inlined_call_operand.vmem [shape: f32[1,16], index: 3, kind: input, shape index: {}]
  %s4 = inlined_call_operand.vmem [shape: f32[1,16], index: 4, kind: input, shape index: {}]
  %s5 = inlined_call_operand.vmem [shape: bf16[40,8], index: 5, kind: input, shape index: {}]
  %s6 = inlined_call_operand.vmem [shape: f32[1,8], index: 6, kind: input, shape index: {}]
  %s7 = inlined_call_operand.vmem [shape: f32[1,8], index: 7, kind: input, shape index: {}]
  %s8 = inlined_call_operand.vmem [shape: f32[1,8], index: 8, kind: input, shape index: {}]
  %s9 = inlined_call_operand.vmem [shape: bf16[24,8], index: 9, kind: input, shape index: {}]
  %s10 = inlined_call_operand.vmem [shape: f32[1,8], index: 10, kind: input, shape index: {}]
  %s11 = inlined_call_operand.vmem [shape: f32[1,8], index: 11, kind: input, shape index: {}]
  %s12 = inlined_call_operand.vmem [shape: f32[1,8], index: 12, kind: input, shape index: {}]
  %s13 = inlined_call_operand.vmem [shape: f32[64,8], index: 13, kind: output, shape index: {}]
  %s14 = sld [smem:[#allocation0]]
  $region62: #{tpu_custom_call.1} parent=0
    _
  %s16 = ssub.s32 1, %s14
  %s17 = scalar_select 0, %s16, %s14
  // Predicated region
  $region2: #{tpu_custom_call.1} parent=0 // pred_check
    _
  $region3: #{tpu_custom_call.1} parent=0 // pred_check_branch
    %19 = sbr.rel (0) target = $region5
  $region4: #{tpu_custom_call.1} parent=0 // pred_region
    _
  $region5: #{tpu_custom_call.1} parent=0 // pred_fallthru
    _
  // Predicated region
  $region6: #{tpu_custom_call.1} parent=0 // pred_check
    _
  $region7: #{tpu_custom_call.1} parent=0 // pred_check_branch
    %21 = sbr.rel (0) target = $region9
  $region8: #{tpu_custom_call.1} parent=0 // pred_region
    _
  $region9: #{tpu_custom_call.1} parent=0 // pred_fallthru
    _
  // Predicated region
  $region10: #{tpu_custom_call.1} parent=0 // pred_check
    _
  $region11: #{tpu_custom_call.1} parent=0 // pred_check_branch
    %23 = sbr.rel (0) target = $region13
  $region12: #{tpu_custom_call.1} parent=0 // pred_region
    _
  $region13: #{tpu_custom_call.1} parent=0 // pred_fallthru
    _
  // Predicated region
  $region14: #{tpu_custom_call.1} parent=0 // pred_check
    _
  $region15: #{tpu_custom_call.1} parent=0 // pred_check_branch
    %25 = sbr.rel (0) target = $region17
  $region16: #{tpu_custom_call.1} parent=0 // pred_region
    _
  $region17: #{tpu_custom_call.1} parent=0 // pred_fallthru
    _
  // Predicated region
  $region18: #{tpu_custom_call.1} parent=0 // pred_check
    _
  $region19: #{tpu_custom_call.1} parent=0 // pred_check_branch
    %27 = sbr.rel (0) target = $region21
  $region20: #{tpu_custom_call.1} parent=0 // pred_region
    _
  $region21: #{tpu_custom_call.1} parent=0 // pred_fallthru
    _
  // Predicated region
  $region22: #{tpu_custom_call.1} parent=0 // pred_check
    _
  $region23: #{tpu_custom_call.1} parent=0 // pred_check_branch
    %29 = sbr.rel (0) target = $region25
  $region24: #{tpu_custom_call.1} parent=0 // pred_region
    _
  $region25: #{tpu_custom_call.1} parent=0 // pred_fallthru
    _
  // Predicated region
  $region26: #{tpu_custom_call.1} parent=0 // pred_check
    _
  $region27: #{tpu_custom_call.1} parent=0 // pred_check_branch
    %31 = sbr.rel (0) target = $region29
  $region28: #{tpu_custom_call.1} parent=0 // pred_region
    _
  $region29: #{tpu_custom_call.1} parent=0 // pred_fallthru
    _
  // Predicated region
  $region30: #{tpu_custom_call.1} parent=0 // pred_check
    _
  $region31: #{tpu_custom_call.1} parent=0 // pred_check_branch
    %33 = sbr.rel (0) target = $region33
  $region32: #{tpu_custom_call.1} parent=0 // pred_region
    _
  $region33: #{tpu_custom_call.1} parent=0 // pred_fallthru
    _
  // Predicated region
  $region34: #{tpu_custom_call.1} parent=0 // pred_check
    _
  $region35: #{tpu_custom_call.1} parent=0 // pred_check_branch
    %35 = sbr.rel (0) target = $region37
  $region36: #{tpu_custom_call.1} parent=0 // pred_region
    _
  $region37: #{tpu_custom_call.1} parent=0 // pred_fallthru
    _
  // Predicated region
  $region38: #{tpu_custom_call.1} parent=0 // pred_check
    _
  $region39: #{tpu_custom_call.1} parent=0 // pred_check_branch
    %37 = sbr.rel (0) target = $region41
  $region40: #{tpu_custom_call.1} parent=0 // pred_region
    _
  $region41: #{tpu_custom_call.1} parent=0 // pred_fallthru
    _
  // Predicated region
  $region42: #{tpu_custom_call.1} parent=0 // pred_check
    _
  $region43: #{tpu_custom_call.1} parent=0 // pred_check_branch
    %39 = sbr.rel (0) target = $region45
  $region44: #{tpu_custom_call.1} parent=0 // pred_region
    _
  $region45: #{tpu_custom_call.1} parent=0 // pred_fallthru
    _
  // Predicated region
  $region46: #{tpu_custom_call.1} parent=0 // pred_check
    _
  $region47: #{tpu_custom_call.1} parent=0 // pred_check_branch
    %41 = sbr.rel (0) target = $region49
  $region48: #{tpu_custom_call.1} parent=0 // pred_region
    _
  $region49: #{tpu_custom_call.1} parent=0 // pred_fallthru
    _
  // Predicated region
  $region50: #{tpu_custom_call.1} parent=0 // pred_check
    _
  $region51: #{tpu_custom_call.1} parent=0 // pred_check_branch
    %43 = sbr.rel (0) target = $region53
  $region52: #{tpu_custom_call.1} parent=0 // pred_region
    _
  $region53: #{tpu_custom_call.1} parent=0 // pred_fallthru
    _
  %v45 = vld [vmem:[%s0] sm:$0xff]
  %v46 = vld [vmem:[%s0 + $0x8] sm:$0xff]
  %v47 = vld [vmem:[%s0 + $0x10] sm:$0xff]
  %v48 = vld [vmem:[%s0 + $0x18] sm:$0xff]
  %v49 = vld [vmem:[%s0 + $0x20] sm:$0xff]
  %v50 = vld [vmem:[%s0 + $0x28] sm:$0xff]
  %v51 = vld [vmem:[%s0 + $0x30] sm:$0xff]
  %v52 = vld [vmem:[%s0 + $0x38] sm:$0xff]
  %v53 = vpack.c.bf16 %v46, %v45
  %v54 = vpack.c.bf16 %v48, %v47
  %v55 = vpack.c.bf16 %v50, %v49
  %v56 = vpack.c.bf16 %v52, %v51
  %v61 = vrot.slane %v53, 6
  %v62 = vrot.slane %v54, 6
  %v63 = vrot.slane %v55, 6
  %v64 = vrot.slane %v56, 6
  %vm65 = vcmask 1041408
  %v68 = vsel %vm65, 0, %v61
  %v70 = vsel %vm65, 0, %v62
  %v72 = vsel %vm65, 0, %v63
  %v74 = vsel %vm65, 0, %v64
  %v75 = vsel %vm65, %v61, 0
  %v76 = vsel %vm65, %v62, 0
  %v77 = vsel %vm65, %v63, 0
  %v78 = vsel %vm65, %v64, 0
  %vm79 = vsmask.f32 7424
  %v80 = vshrl.u32 %v68, 16
  %v82 = vshll.u32 %v68, 16
  %v84 = vrot.slane %v82, 1
  %v85 = vor.u32 %v80, %v84
  %v86 = vshll.u32 %v75, 16
  %v88 = vrot.slane %v86, 1
  %v89 = vsel %vm79, %v85, %v88
  %v90 = vshrl.u32 %v70, 16
  %v92 = vshll.u32 %v70, 16
  %v94 = vrot.slane %v92, 1
  %v95 = vor.u32 %v90, %v94
  %v96 = vshll.u32 %v76, 16
  %v98 = vrot.slane %v96, 1
  %v99 = vsel %vm79, %v95, %v98
  %v100 = vshrl.u32 %v72, 16
  %v102 = vshll.u32 %v72, 16
  %v104 = vrot.slane %v102, 1
  %v105 = vor.u32 %v100, %v104
  %v106 = vshll.u32 %v77, 16
  %v108 = vrot.slane %v106, 1
  %v109 = vsel %vm79, %v105, %v108
  %v110 = vshrl.u32 %v74, 16
  %v112 = vshll.u32 %v74, 16
  %v114 = vrot.slane %v112, 1
  %v115 = vor.u32 %v110, %v114
  %v116 = vshll.u32 %v78, 16
  %v118 = vrot.slane %v116, 1
  %v119 = vsel %vm79, %v115, %v118
  %120 = vrot.lane.b32.xlu0 %v89, 4
  %v121 = vpop.permute.xlu0 %120
  %122 = vrot.lane.b32.xlu0 %v99, 4
  %v123 = vpop.permute.xlu0 %122
  %124 = vrot.lane.b32.xlu0 %v109, 4
  %v125 = vpop.permute.xlu0 %124
  %126 = vrot.lane.b32.xlu0 %v119, 4
  %v127 = vpop.permute.xlu0 %126
  %vm136 = vcmask 1046528
  %v137 = vrot.slane %v68, 1
  %v138 = vrot.slane %v75, 1
  %v139 = vsel %vm136, %v137, %v138
  %v140 = vrot.slane %v70, 1
  %v141 = vrot.slane %v76, 1
  %v142 = vsel %vm136, %v140, %v141
  %v143 = vrot.slane %v72, 1
  %v144 = vrot.slane %v77, 1
  %v145 = vsel %vm136, %v143, %v144
  %v146 = vrot.slane %v74, 1
  %v147 = vrot.slane %v78, 1
  %v148 = vsel %vm136, %v146, %v147
  %149 = vrot.lane.b32.xlu0 %v139, 8
  %v150 = vpop.permute.xlu0 %149
  %151 = vrot.lane.b32.xlu0 %v142, 8
  %v152 = vpop.permute.xlu0 %151
  %153 = vrot.lane.b32.xlu0 %v145, 8
  %v154 = vpop.permute.xlu0 %153
  %155 = vrot.lane.b32.xlu0 %v148, 8
  %v156 = vpop.permute.xlu0 %155
  %vm157 = vsmask.f32 6400
  %v158 = vrot.slane %v80, 1
  %v159 = vrot.slane %v82, 2
  %v160 = vor.u32 %v158, %v159
  %v161 = vshrl.u32 %v75, 16
  %v163 = vrot.slane %v161, 1
  %v164 = vrot.slane %v86, 2
  %v165 = vor.u32 %v163, %v164
  %v166 = vsel %vm157, %v160, %v165
  %v167 = vrot.slane %v90, 1
  %v168 = vrot.slane %v92, 2
  %v169 = vor.u32 %v167, %v168
  %v170 = vshrl.u32 %v76, 16
  %v172 = vrot.slane %v170, 1
  %v173 = vrot.slane %v96, 2
  %v174 = vor.u32 %v172, %v173
  %v175 = vsel %vm157, %v169, %v174
  %v176 = vrot.slane %v100, 1
  %v177 = vrot.slane %v102, 2
  %v178 = vor.u32 %v176, %v177
  %v179 = vshrl.u32 %v77, 16
  %v181 = vrot.slane %v179, 1
  %v182 = vrot.slane %v106, 2
  %v183 = vor.u32 %v181, %v182
  %v184 = vsel %vm157, %v178, %v183
  %v185 = vrot.slane %v110, 1
  %v186 = vrot.slane %v112, 2
  %v187 = vor.u32 %v185, %v186
  %v188 = vshrl.u32 %v78, 16
  %v190 = vrot.slane %v188, 1
  %v191 = vrot.slane %v116, 2
  %v192 = vor.u32 %v190, %v191
  %v193 = vsel %vm157, %v187, %v192
  %194 = vrot.lane.b32.xlu0 %v166, 12
  %v195 = vpop.permute.xlu0 %194
  %196 = vrot.lane.b32.xlu0 %v175, 12
  %v197 = vpop.permute.xlu0 %196
  %198 = vrot.lane.b32.xlu0 %v184, 12
  %v199 = vpop.permute.xlu0 %198
  %200 = vrot.lane.b32.xlu0 %v193, 12
  %v201 = vpop.permute.xlu0 %200
  %vm202 = vcmask 1045504
  %v203 = vrot.slane %v68, 2
  %v204 = vrot.slane %v75, 2
  %v205 = vsel %vm202, %v203, %v204
  %v206 = vrot.slane %v70, 2
  %v207 = vrot.slane %v76, 2
  %v208 = vsel %vm202, %v206, %v207
  %v209 = vrot.slane %v72, 2
  %v210 = vrot.slane %v77, 2
  %v211 = vsel %vm202, %v209, %v210
  %v212 = vrot.slane %v74, 2
  %v213 = vrot.slane %v78, 2
  %v214 = vsel %vm202, %v212, %v213
  %215 = vrot.lane.b32.xlu0 %v205, 16
  %v216 = vpop.permute.xlu0 %215
  %217 = vrot.lane.b32.xlu0 %v208, 16
  %v218 = vpop.permute.xlu0 %217
  %219 = vrot.lane.b32.xlu0 %v211, 16
  %v220 = vpop.permute.xlu0 %219
  %221 = vrot.lane.b32.xlu0 %v214, 16
  %v222 = vpop.permute.xlu0 %221
  %vm223 = vsmask.f32 5376
  %v224 = vrot.slane %v80, 2
  %v225 = vrot.slane %v82, 3
  %v226 = vor.u32 %v224, %v225
  %v227 = vrot.slane %v161, 2
  %v228 = vrot.slane %v86, 3
  %v229 = vor.u32 %v227, %v228
  %v230 = vsel %vm223, %v226, %v229
  %v231 = vrot.slane %v90, 2
  %v232 = vrot.slane %v92, 3
  %v233 = vor.u32 %v231, %v232
  %v234 = vrot.slane %v170, 2
  %v235 = vrot.slane %v96, 3
  %v236 = vor.u32 %v234, %v235
  %v237 = vsel %vm223, %v233, %v236
  %v238 = vrot.slane %v100, 2
  %v239 = vrot.slane %v102, 3
  %v240 = vor.u32 %v238, %v239
  %v241 = vrot.slane %v179, 2
  %v242 = vrot.slane %v106, 3
  %v243 = vor.u32 %v241, %v242
  %v244 = vsel %vm223, %v240, %v243
  %v245 = vrot.slane %v110, 2
  %v246 = vrot.slane %v112, 3
  %v247 = vor.u32 %v245, %v246
  %v248 = vrot.slane %v188, 2
  %v249 = vrot.slane %v116, 3
  %v250 = vor.u32 %v248, %v249
  %v251 = vsel %vm223, %v247, %v250
  %252 = vrot.lane.b32.xlu0 %v230, 20
  %v253 = vpop.permute.xlu0 %252
  %254 = vrot.lane.b32.xlu0 %v237, 20
  %v255 = vpop.permute.xlu0 %254
  %256 = vrot.lane.b32.xlu0 %v244, 20
  %v257 = vpop.permute.xlu0 %256
  %258 = vrot.lane.b32.xlu0 %v251, 20
  %v259 = vpop.permute.xlu0 %258
  %vm260 = vcmask 1044480
  %v261 = vrot.slane %v68, 3
  %v262 = vrot.slane %v75, 3
  %v263 = vsel %vm260, %v261, %v262
  %v264 = vrot.slane %v70, 3
  %v265 = vrot.slane %v76, 3
  %v266 = vsel %vm260, %v264, %v265
  %v267 = vrot.slane %v72, 3
  %v268 = vrot.slane %v77, 3
  %v269 = vsel %vm260, %v267, %v268
  %v270 = vrot.slane %v74, 3
  %v271 = vrot.slane %v78, 3
  %v272 = vsel %vm260, %v270, %v271
  %273 = vrot.lane.b32.xlu0 %v263, 24
  %v274 = vpop.permute.xlu0 %273
  %275 = vrot.lane.b32.xlu0 %v266, 24
  %v276 = vpop.permute.xlu0 %275
  %277 = vrot.lane.b32.xlu0 %v269, 24
  %v278 = vpop.permute.xlu0 %277
  %279 = vrot.lane.b32.xlu0 %v272, 24
  %v280 = vpop.permute.xlu0 %279
  %vm281 = vsmask.f32 4352
  %v282 = vrot.slane %v80, 3
  %v283 = vrot.slane %v82, 4
  %v284 = vor.u32 %v282, %v283
  %v285 = vrot.slane %v161, 3
  %v286 = vrot.slane %v86, 4
  %v287 = vor.u32 %v285, %v286
  %v288 = vsel %vm281, %v284, %v287
  %v289 = vrot.slane %v90, 3
  %v290 = vrot.slane %v92, 4
  %v291 = vor.u32 %v289, %v290
  %v292 = vrot.slane %v170, 3
  %v293 = vrot.slane %v96, 4
  %v294 = vor.u32 %v292, %v293
  %v295 = vsel %vm281, %v291, %v294
  %v296 = vrot.slane %v100, 3
  %v297 = vrot.slane %v102, 4
  %v298 = vor.u32 %v296, %v297
  %v299 = vrot.slane %v179, 3
  %v300 = vrot.slane %v106, 4
  %v301 = vor.u32 %v299, %v300
  %v302 = vsel %vm281, %v298, %v301
  %v303 = vrot.slane %v110, 3
  %v304 = vrot.slane %v112, 4
  %v305 = vor.u32 %v303, %v304
  %v306 = vrot.slane %v188, 3
  %v307 = vrot.slane %v116, 4
  %v308 = vor.u32 %v306, %v307
  %v309 = vsel %vm281, %v305, %v308
  %310 = vrot.lane.b32.xlu0 %v288, 28
  %v311 = vpop.permute.xlu0 %310
  %312 = vrot.lane.b32.xlu0 %v295, 28
  %v313 = vpop.permute.xlu0 %312
  %314 = vrot.lane.b32.xlu0 %v302, 28
  %v315 = vpop.permute.xlu0 %314
  %316 = vrot.lane.b32.xlu0 %v309, 28
  %v317 = vpop.permute.xlu0 %316
  %vm318 = vcmask 1043456
  %v319 = vrot.slane %v68, 4
  %v320 = vrot.slane %v75, 4
  %v321 = vsel %vm318, %v319, %v320
  %v322 = vrot.slane %v70, 4
  %v323 = vrot.slane %v76, 4
  %v324 = vsel %vm318, %v322, %v323
  %v325 = vrot.slane %v72, 4
  %v326 = vrot.slane %v77, 4
  %v327 = vsel %vm318, %v325, %v326
  %v328 = vrot.slane %v74, 4
  %v329 = vrot.slane %v78, 4
  %v330 = vsel %vm318, %v328, %v329
  %331 = vrot.lane.b32.xlu0 %v321, 32
  %v332 = vpop.permute.xlu0 %331
  %333 = vrot.lane.b32.xlu0 %v324, 32
  %v334 = vpop.permute.xlu0 %333
  %335 = vrot.lane.b32.xlu0 %v327, 32
  %v336 = vpop.permute.xlu0 %335
  %337 = vrot.lane.b32.xlu0 %v330, 32
  %v338 = vpop.permute.xlu0 %337
  %vm339 = vcmask 31744
  %v341 = vsel %vm339, %v68, %v121
  %v343 = vsel %vm339, %v70, %v123
  %v345 = vsel %vm339, %v72, %v125
  %v347 = vsel %vm339, %v74, %v127
  %vm348 = vcmask 64512
  %v350 = vsel %vm348, %v341, %v150
  %v352 = vsel %vm348, %v343, %v152
  %v354 = vsel %vm348, %v345, %v154
  %v356 = vsel %vm348, %v347, %v156
  %vm357 = vcmask 97280
  %v359 = vsel %vm357, %v350, %v195
  %v361 = vsel %vm357, %v352, %v197
  %v363 = vsel %vm357, %v354, %v199
  %v365 = vsel %vm357, %v356, %v201
  %vm366 = vcmask 130048
  %v368 = vsel %vm366, %v359, %v216
  %v370 = vsel %vm366, %v361, %v218
  %v372 = vsel %vm366, %v363, %v220
  %v374 = vsel %vm366, %v365, %v222
  %vm375 = vcmask 162816
  %v377 = vsel %vm375, %v368, %v253
  %v379 = vsel %vm375, %v370, %v255
  %v381 = vsel %vm375, %v372, %v257
  %v383 = vsel %vm375, %v374, %v259
  %vm384 = vcmask 195584
  %v386 = vsel %vm384, %v377, %v274
  %v388 = vsel %vm384, %v379, %v276
  %v390 = vsel %vm384, %v381, %v278
  %v392 = vsel %vm384, %v383, %v280
  %vm393 = vcmask 228352
  %v395 = vsel %vm393, %v386, %v311
  %v397 = vsel %vm393, %v388, %v313
  %v399 = vsel %vm393, %v390, %v315
  %v401 = vsel %vm393, %v392, %v317
  %vm402 = vcmask 261120
  %v404 = vsel %vm402, %v395, %v332
  %v406 = vsel %vm402, %v397, %v334
  %v408 = vsel %vm402, %v399, %v336
  %v410 = vsel %vm402, %v401, %v338
  %v411 = vld [vmem:[%s1] sm:$0xf]
  %v412 = vld [vmem:[%s1 + $0x4] sm:$0xf]
  %v413 = vld [vmem:[%s1 + $0x8] sm:$0xf]
  %v414 = vld [vmem:[%s1 + $0xc] sm:$0xf]
  %v415 = vld [vmem:[%s1 + $0x10] sm:$0x3]
  %v416 = vld [vmem:[%s2] sm:$0x1]
  %v418 = vlaneseq
  %v419 = vshrl.u32 %v418, 7
  %v420 = vsub.s32 0, %v419
  %v421 = vrot.slane %v416, %v420
  %v428 = vunpack.c.l.b16 %v411
  %v429 = vunpack.c.l.b16 %v412
  %v430 = vunpack.c.l.b16 %v413
  %v431 = vunpack.c.l.b16 %v414
  %v432 = vunpack.c.l.b16 %v415
  %v433 = vpack.c.b16 %v429, %v428
  %v434 = vpack.c.b16 %v431, %v430
  %v435 = vpack.c.b16 %v432, %v432
  %vm438 = vcmask 293888
  %v439 = vsel %vm438, %v404, 0
  %v441 = vsel %vm438, %v406, 0
  %v443 = vsel %vm438, %v408, 0
  %v445 = vsel %vm438, %v410, 0
  %v448 = vsel %vm65, %v435, 0
  %450 = vmatprep.subr.bf16.mxu0 0
  %451 = vmatpush1.bf16.msra.mxu0 %v433
  %452 = vmatprep.subr.bf16.mxu0 0
  %453 = vmatpush1.bf16.msra.mxu0 %v434
  %454 = vmatprep.subr.bf16.mxu0 0
  %455 = vmatpush1.bf16.msra.mxu0 %v448
  %456 = vmatprep.subr.bf16.mxu0 0
  %457 = vmatpush1.bf16.msra.mxu0 0
  %458 = vmatprep.subr.bf16.mxu0 0
  %459 = vmatpush1.bf16.msra.mxu0 0
  %460 = vmatprep.subr.bf16.mxu0 0
  %461 = vmatpush1.bf16.msra.mxu0 0
  %462 = vmatprep.subr.bf16.mxu0 0
  %463 = vmatpush1.bf16.msra.mxu0 0
  %464 = vmatprep.subr.bf16.mxu0 0
  %465 = vmatpush1.bf16.msra.mxu0 0
  %466 = vmatprep.subr.bf16.mxu0 0
  %467 = vmatpush1.bf16.msra.mxu0 0
  %468 = vmatprep.subr.bf16.mxu0 0
  %469 = vmatpush1.bf16.msra.mxu0 0
  %470 = vmatprep.subr.bf16.mxu0 0
  %471 = vmatpush1.bf16.msra.mxu0 0
  %472 = vmatprep.subr.bf16.mxu0 0
  %473 = vmatpush1.bf16.msra.mxu0 0
  %474 = vmatprep.subr.bf16.mxu0 0
  %475 = vmatpush1.bf16.msra.mxu0 0
  %476 = vmatprep.subr.bf16.mxu0 0
  %477 = vmatpush1.bf16.msra.mxu0 0
  %478 = vmatprep.subr.bf16.mxu0 0
  %479 = vmatpush1.bf16.msra.mxu0 0
  %480 = vmatprep.subr.bf16.mxu0 0
  %481 = vmatpush1.bf16.msra.mxu0 0
  %482 = vmatprep.mubr.bf16.mxu0 0
  %483 = vmatmul.mubr.bf16.gmra.mrb[0].mxu0 %v439
  %v484 = vpop.f32.mrb[0].mxu0
  %v485 = vadd.f32 %v421, %v484
  %v486 = vpop.f32.mrb[0].mxu0
  %v487 = vpop.f32.mrb[0].mxu0
  %v488 = vadd.f32 %v421, %v487
  %v489 = vpop.f32.mrb[0].mxu0
  %490 = vmatprep.mubr.bf16.mxu0 0
  %491 = vmatmul.mubr.bf16.gmra.mrb[0].mxu0 %v441
  %v492 = vpop.f32.mrb[0].mxu0
  %v493 = vadd.f32 %v421, %v492
  %v494 = vpop.f32.mrb[0].mxu0
  %v495 = vpop.f32.mrb[0].mxu0
  %v496 = vadd.f32 %v421, %v495
  %v497 = vpop.f32.mrb[0].mxu0
  %498 = vmatprep.mubr.bf16.mxu0 0
  %499 = vmatmul.mubr.bf16.gmra.mrb[0].mxu0 %v443
  %v500 = vpop.f32.mrb[0].mxu0
  %v501 = vadd.f32 %v421, %v500
  %v502 = vpop.f32.mrb[0].mxu0
  %v503 = vpop.f32.mrb[0].mxu0
  %v504 = vadd.f32 %v421, %v503
  %v505 = vpop.f32.mrb[0].mxu0
  %506 = vmatprep.mubr.bf16.mxu0 0
  %507 = vmatmul.mubr.bf16.gmra.mrb[0].mxu0 %v445
  %v508 = vpop.f32.mrb[0].mxu0
  %v509 = vadd.f32 %v421, %v508
  %v510 = vpop.f32.mrb[0].mxu0
  %v511 = vpop.f32.mrb[0].mxu0
  %v512 = vadd.f32 %v421, %v511
  %v513 = vpop.f32.mrb[0].mxu0
  %514 = vdwg.mxu0
  %v515 = vld [vmem:[%s3] sm:$0x1]
  %v516 = vld [vmem:[%s4] sm:$0x1]
  %v517 = vsel %vm366, %v485, 0.0
  %v518 = vsel %vm366, %v488, 0.0
  %v519 = vadd.f32 %v517, %v518
  %v520 = vsel %vm366, %v493, 0.0
  %v521 = vadd.f32 %v519, %v520
  %v522 = vsel %vm366, %v496, 0.0
  %v523 = vadd.f32 %v521, %v522
  %v524 = vsel %vm366, %v501, 0.0
  %v525 = vadd.f32 %v523, %v524
  %v526 = vsel %vm366, %v504, 0.0
  %v527 = vadd.f32 %v525, %v526
  %v528 = vsel %vm366, %v509, 0.0
  %v529 = vadd.f32 %v527, %v528
  %v530 = vsel %vm366, %v512, 0.0
  %v531 = vadd.f32 %v529, %v530
  %v532 = vrot.slane %v531, 4
  %v533 = vadd.f32 %v531, %v532
  %v534 = vrot.slane %v533, 2
  %v535 = vadd.f32 %v533, %v534
  %v536 = vrot.slane %v535, 1
  %v537 = vadd.f32 %v535, %v536
  %v538 = vrcp.pop 64.0
  %v539 = vmul.f32 %v537, %v538
  %v540 = vsub.f32 %v485, %v539
  %v541 = vsub.f32 %v488, %v539
  %v542 = vsub.f32 %v493, %v539
  %v543 = vsub.f32 %v496, %v539
  %v544 = vsub.f32 %v501, %v539
  %v545 = vsub.f32 %v504, %v539
  %v546 = vsub.f32 %v509, %v539
  %v547 = vsub.f32 %v512, %v539
  %v548 = vmul.f32 %v540, %v540
  %v549 = vmul.f32 %v541, %v541
  %v550 = vmul.f32 %v542, %v542
  %v551 = vmul.f32 %v543, %v543
  %v552 = vmul.f32 %v544, %v544
  %v553 = vmul.f32 %v545, %v545
  %v554 = vmul.f32 %v546, %v546
  %v555 = vmul.f32 %v547, %v547
  %v556 = vsel %vm366, %v548, 0.0
  %v557 = vsel %vm366, %v549, 0.0
  %v558 = vadd.f32 %v556, %v557
  %v559 = vsel %vm366, %v550, 0.0
  %v560 = vadd.f32 %v558, %v559
  %v561 = vsel %vm366, %v551, 0.0
  %v562 = vadd.f32 %v560, %v561
  %v563 = vsel %vm366, %v552, 0.0
  %v564 = vadd.f32 %v562, %v563
  %v565 = vsel %vm366, %v553, 0.0
  %v566 = vadd.f32 %v564, %v565
  %v567 = vsel %vm366, %v554, 0.0
  %v568 = vadd.f32 %v566, %v567
  %v569 = vsel %vm366, %v555, 0.0
  %v570 = vadd.f32 %v568, %v569
  %v571 = vrot.slane %v570, 4
  %v572 = vadd.f32 %v570, %v571
  %v573 = vrot.slane %v572, 2
  %v574 = vadd.f32 %v572, %v573
  %v575 = vrot.slane %v574, 1
  %v576 = vadd.f32 %v574, %v575
  %v577 = vmul.f32 %v576, %v538
  %v578 = vadd.f32 %v577, 1e-05
  %v579 = vrsqrt.pop %v578
  %v580 = vmul.f32 %v540, %v579
  %v581 = vmul.f32 %v541, %v579
  %v582 = vmul.f32 %v542, %v579
  %v583 = vmul.f32 %v543, %v579
  %v584 = vmul.f32 %v544, %v579
  %v585 = vmul.f32 %v545, %v579
  %v586 = vmul.f32 %v546, %v579
  %v587 = vmul.f32 %v547, %v579
  %v589 = vlaneseq
  %v590 = vshrl.u32 %v589, 7
  %v591 = vsub.s32 0, %v590
  %v592 = vrot.slane %v515, %v591
  %v594 = vmul.f32 %v592, %v580
  %v595 = vmul.f32 %v592, %v581
  %v596 = vmul.f32 %v592, %v582
  %v597 = vmul.f32 %v592, %v583
  %v598 = vmul.f32 %v592, %v584
  %v599 = vmul.f32 %v592, %v585
  %v600 = vmul.f32 %v592, %v586
  %v601 = vmul.f32 %v592, %v587
  %v603 = vlaneseq
  %v604 = vshrl.u32 %v603, 7
  %v605 = vsub.s32 0, %v604
  %v606 = vrot.slane %v516, %v605
  %v608 = vadd.f32 %v594, %v606
  %v609 = vadd.f32 %v595, %v606
  %v610 = vadd.f32 %v596, %v606
  %v611 = vadd.f32 %v597, %v606
  %v612 = vadd.f32 %v598, %v606
  %v613 = vadd.f32 %v599, %v606
  %v614 = vadd.f32 %v600, %v606
  %v615 = vadd.f32 %v601, %v606
  %v616 = vmax.f32 %v608, 0.0
  %v617 = vmax.f32 %v609, 0.0
  %v618 = vmax.f32 %v610, 0.0
  %v619 = vmax.f32 %v611, 0.0
  %v620 = vmax.f32 %v612, 0.0
  %v621 = vmax.f32 %v613, 0.0
  %v622 = vmax.f32 %v614, 0.0
  %v623 = vmax.f32 %v615, 0.0
  %v624 = vpack.c.bf16 %v617, %v616
  %v625 = vpack.c.bf16 %v619, %v618
  %v626 = vpack.c.bf16 %v621, %v620
  %v627 = vpack.c.bf16 %v623, %v622
  %v632 = vrot.slane %v624, 7
  %v633 = vrot.slane %v625, 7
  %v634 = vrot.slane %v626, 7
  %v635 = vrot.slane %v627, 7
  %vm636 = vcmask 1040384
  %v638 = vsel %vm636, 0, %v632
  %v640 = vsel %vm636, 0, %v633
  %v642 = vsel %vm636, 0, %v634
  %v644 = vsel %vm636, 0, %v635
  %v645 = vsel %vm636, %v632, 0
  %v646 = vsel %vm636, %v633, 0
  %v647 = vsel %vm636, %v634, 0
  %v648 = vsel %vm636, %v635, 0
  %v649 = vshrl.u32 %v638, 16
  %v651 = vshll.u32 %v638, 16
  %v653 = vrot.slane %v651, 1
  %v654 = vor.u32 %v649, %v653
  %v655 = vshll.u32 %v645, 16
  %v657 = vrot.slane %v655, 1
  %v658 = vsel %vm79, %v654, %v657
  %v659 = vshrl.u32 %v640, 16
  %v661 = vshll.u32 %v640, 16
  %v663 = vrot.slane %v661, 1
  %v664 = vor.u32 %v659, %v663
  %v665 = vshll.u32 %v646, 16
  %v667 = vrot.slane %v665, 1
  %v668 = vsel %vm79, %v664, %v667
  %v669 = vshrl.u32 %v642, 16
  %v671 = vshll.u32 %v642, 16
  %v673 = vrot.slane %v671, 1
  %v674 = vor.u32 %v669, %v673
  %v675 = vshll.u32 %v647, 16
  %v677 = vrot.slane %v675, 1
  %v678 = vsel %vm79, %v674, %v677
  %v679 = vshrl.u32 %v644, 16
  %v681 = vshll.u32 %v644, 16
  %v683 = vrot.slane %v681, 1
  %v684 = vor.u32 %v679, %v683
  %v685 = vshll.u32 %v648, 16
  %v687 = vrot.slane %v685, 1
  %v688 = vsel %vm79, %v684, %v687
  %689 = vrot.lane.b32.xlu0 %v658, 8
  %v690 = vpop.permute.xlu0 %689
  %691 = vrot.lane.b32.xlu0 %v668, 8
  %v692 = vpop.permute.xlu0 %691
  %693 = vrot.lane.b32.xlu0 %v678, 8
  %v694 = vpop.permute.xlu0 %693
  %695 = vrot.lane.b32.xlu0 %v688, 8
  %v696 = vpop.permute.xlu0 %695
  %v705 = vrot.slane %v638, 1
  %v706 = vrot.slane %v645, 1
  %v707 = vsel %vm136, %v705, %v706
  %v708 = vrot.slane %v640, 1
  %v709 = vrot.slane %v646, 1
  %v710 = vsel %vm136, %v708, %v709
  %v711 = vrot.slane %v642, 1
  %v712 = vrot.slane %v647, 1
  %v713 = vsel %vm136, %v711, %v712
  %v714 = vrot.slane %v644, 1
  %v715 = vrot.slane %v648, 1
  %v716 = vsel %vm136, %v714, %v715
  %717 = vrot.lane.b32.xlu0 %v707, 16
  %v718 = vpop.permute.xlu0 %717
  %719 = vrot.lane.b32.xlu0 %v710, 16
  %v720 = vpop.permute.xlu0 %719
  %721 = vrot.lane.b32.xlu0 %v713, 16
  %v722 = vpop.permute.xlu0 %721
  %723 = vrot.lane.b32.xlu0 %v716, 16
  %v724 = vpop.permute.xlu0 %723
  %v725 = vrot.slane %v649, 1
  %v726 = vrot.slane %v651, 2
  %v727 = vor.u32 %v725, %v726
  %v728 = vshrl.u32 %v645, 16
  %v730 = vrot.slane %v728, 1
  %v731 = vrot.slane %v655, 2
  %v732 = vor.u32 %v730, %v731
  %v733 = vsel %vm157, %v727, %v732
  %v734 = vrot.slane %v659, 1
  %v735 = vrot.slane %v661, 2
  %v736 = vor.u32 %v734, %v735
  %v737 = vshrl.u32 %v646, 16
  %v739 = vrot.slane %v737, 1
  %v740 = vrot.slane %v665, 2
  %v741 = vor.u32 %v739, %v740
  %v742 = vsel %vm157, %v736, %v741
  %v743 = vrot.slane %v669, 1
  %v744 = vrot.slane %v671, 2
  %v745 = vor.u32 %v743, %v744
  %v746 = vshrl.u32 %v647, 16
  %v748 = vrot.slane %v746, 1
  %v749 = vrot.slane %v675, 2
  %v750 = vor.u32 %v748, %v749
  %v751 = vsel %vm157, %v745, %v750
  %v752 = vrot.slane %v679, 1
  %v753 = vrot.slane %v681, 2
  %v754 = vor.u32 %v752, %v753
  %v755 = vshrl.u32 %v648, 16
  %v757 = vrot.slane %v755, 1
  %v758 = vrot.slane %v685, 2
  %v759 = vor.u32 %v757, %v758
  %v760 = vsel %vm157, %v754, %v759
  %761 = vrot.lane.b32.xlu0 %v733, 24
  %v762 = vpop.permute.xlu0 %761
  %763 = vrot.lane.b32.xlu0 %v742, 24
  %v764 = vpop.permute.xlu0 %763
  %765 = vrot.lane.b32.xlu0 %v751, 24
  %v766 = vpop.permute.xlu0 %765
  %767 = vrot.lane.b32.xlu0 %v760, 24
  %v768 = vpop.permute.xlu0 %767
  %v769 = vrot.slane %v638, 2
  %v770 = vrot.slane %v645, 2
  %v771 = vsel %vm202, %v769, %v770
  %v772 = vrot.slane %v640, 2
  %v773 = vrot.slane %v646, 2
  %v774 = vsel %vm202, %v772, %v773
  %v775 = vrot.slane %v642, 2
  %v776 = vrot.slane %v647, 2
  %v777 = vsel %vm202, %v775, %v776
  %v778 = vrot.slane %v644, 2
  %v779 = vrot.slane %v648, 2
  %v780 = vsel %vm202, %v778, %v779
  %781 = vrot.lane.b32.xlu0 %v771, 32
  %v782 = vpop.permute.xlu0 %781
  %783 = vrot.lane.b32.xlu0 %v774, 32
  %v784 = vpop.permute.xlu0 %783
  %785 = vrot.lane.b32.xlu0 %v777, 32
  %v786 = vpop.permute.xlu0 %785
  %787 = vrot.lane.b32.xlu0 %v780, 32
  %v788 = vpop.permute.xlu0 %787
  %v790 = vsel %vm348, %v638, %v690
  %v792 = vsel %vm348, %v640, %v692
  %v794 = vsel %vm348, %v642, %v694
  %v796 = vsel %vm348, %v644, %v696
  %v798 = vsel %vm366, %v790, %v718
  %v800 = vsel %vm366, %v792, %v720
  %v802 = vsel %vm366, %v794, %v722
  %v804 = vsel %vm366, %v796, %v724
  %v806 = vsel %vm384, %v798, %v762
  %v808 = vsel %vm384, %v800, %v764
  %v810 = vsel %vm384, %v802, %v766
  %v812 = vsel %vm384, %v804, %v768
  %v814 = vsel %vm402, %v806, %v782
  %v816 = vsel %vm402, %v808, %v784
  %v818 = vsel %vm402, %v810, %v786
  %v820 = vsel %vm402, %v812, %v788
  %v821 = vld [vmem:[%s5] sm:$0xf]
  %v822 = vld [vmem:[%s5 + $0x4] sm:$0xf]
  %v823 = vld [vmem:[%s5 + $0x8] sm:$0xf]
  %v824 = vld [vmem:[%s5 + $0xc] sm:$0xf]
  %v825 = vld [vmem:[%s5 + $0x10] sm:$0xf]
  %v826 = vld [vmem:[%s6] sm:$0x1]
  %v828 = vlaneseq
  %v829 = vshrl.u32 %v828, 7
  %v830 = vsub.s32 0, %v829
  %v831 = vrot.slane %v826, %v830
  %v838 = vunpack.c.l.b16 %v821
  %v839 = vunpack.c.l.b16 %v822
  %v840 = vunpack.c.l.b16 %v823
  %v841 = vunpack.c.l.b16 %v824
  %v842 = vunpack.c.l.b16 %v825
  %v843 = vpack.c.b16 %v839, %v838
  %v844 = vpack.c.b16 %v841, %v840
  %v845 = vpack.c.b16 %v842, %v842
  %vm848 = vcmask 326656
  %v849 = vsel %vm848, %v814, 0
  %v851 = vsel %vm848, %v816, 0
  %v853 = vsel %vm848, %v818, 0
  %v855 = vsel %vm848, %v820, 0
  %vm857 = vcmask 1043456
  %v859 = vsel %vm857, %v845, 0
  %861 = vmatprep.subr.bf16.mxu0 0
  %862 = vmatpush1.bf16.msra.mxu0 %v843
  %863 = vmatprep.subr.bf16.mxu0 0
  %864 = vmatpush1.bf16.msra.mxu0 %v844
  %865 = vmatprep.subr.bf16.mxu0 0
  %866 = vmatpush1.bf16.msra.mxu0 %v859
  %867 = vmatprep.subr.bf16.mxu0 0
  %868 = vmatpush1.bf16.msra.mxu0 0
  %869 = vmatprep.subr.bf16.mxu0 0
  %870 = vmatpush1.bf16.msra.mxu0 0
  %871 = vmatprep.subr.bf16.mxu0 0
  %872 = vmatpush1.bf16.msra.mxu0 0
  %873 = vmatprep.subr.bf16.mxu0 0
  %874 = vmatpush1.bf16.msra.mxu0 0
  %875 = vmatprep.subr.bf16.mxu0 0
  %876 = vmatpush1.bf16.msra.mxu0 0
  %877 = vmatprep.subr.bf16.mxu0 0
  %878 = vmatpush1.bf16.msra.mxu0 0
  %879 = vmatprep.subr.bf16.mxu0 0
  %880 = vmatpush1.bf16.msra.mxu0 0
  %881 = vmatprep.subr.bf16.mxu0 0
  %882 = vmatpush1.bf16.msra.mxu0 0
  %883 = vmatprep.subr.bf16.mxu0 0
  %884 = vmatpush1.bf16.msra.mxu0 0
  %885 = vmatprep.subr.bf16.mxu0 0
  %886 = vmatpush1.bf16.msra.mxu0 0
  %887 = vmatprep.subr.bf16.mxu0 0
  %888 = vmatpush1.bf16.msra.mxu0 0
  %889 = vmatprep.subr.bf16.mxu0 0
  %890 = vmatpush1.bf16.msra.mxu0 0
  %891 = vmatprep.subr.bf16.mxu0 0
  %892 = vmatpush1.bf16.msra.mxu0 0
  %893 = vmatprep.mubr.bf16.mxu0 0
  %894 = vmatmul.mubr.bf16.gmra.mrb[0].mxu0 %v849
  %v895 = vpop.f32.mrb[0].mxu0
  %v896 = vadd.f32 %v831, %v895
  %v897 = vpop.f32.mrb[0].mxu0
  %v898 = vpop.f32.mrb[0].mxu0
  %v899 = vadd.f32 %v831, %v898
  %v900 = vpop.f32.mrb[0].mxu0
  %901 = vmatprep.mubr.bf16.mxu0 0
  %902 = vmatmul.mubr.bf16.gmra.mrb[0].mxu0 %v851
  %v903 = vpop.f32.mrb[0].mxu0
  %v904 = vadd.f32 %v831, %v903
  %v905 = vpop.f32.mrb[0].mxu0
  %v906 = vpop.f32.mrb[0].mxu0
  %v907 = vadd.f32 %v831, %v906
  %v908 = vpop.f32.mrb[0].mxu0
  %909 = vmatprep.mubr.bf16.mxu0 0
  %910 = vmatmul.mubr.bf16.gmra.mrb[0].mxu0 %v853
  %v911 = vpop.f32.mrb[0].mxu0
  %v912 = vadd.f32 %v831, %v911
  %v913 = vpop.f32.mrb[0].mxu0
  %v914 = vpop.f32.mrb[0].mxu0
  %v915 = vadd.f32 %v831, %v914
  %v916 = vpop.f32.mrb[0].mxu0
  %917 = vmatprep.mubr.bf16.mxu0 0
  %918 = vmatmul.mubr.bf16.gmra.mrb[0].mxu0 %v855
  %v919 = vpop.f32.mrb[0].mxu0
  %v920 = vadd.f32 %v831, %v919
  %v921 = vpop.f32.mrb[0].mxu0
  %v922 = vpop.f32.mrb[0].mxu0
  %v923 = vadd.f32 %v831, %v922
  %v924 = vpop.f32.mrb[0].mxu0
  %925 = vdwg.mxu0
  %v926 = vld [vmem:[%s7] sm:$0x1]
  %v927 = vld [vmem:[%s8] sm:$0x1]
  %v928 = vsel %vm348, %v896, 0.0
  %v929 = vsel %vm348, %v899, 0.0
  %v930 = vadd.f32 %v928, %v929
  %v931 = vsel %vm348, %v904, 0.0
  %v932 = vadd.f32 %v930, %v931
  %v933 = vsel %vm348, %v907, 0.0
  %v934 = vadd.f32 %v932, %v933
  %v935 = vsel %vm348, %v912, 0.0
  %v936 = vadd.f32 %v934, %v935
  %v937 = vsel %vm348, %v915, 0.0
  %v938 = vadd.f32 %v936, %v937
  %v939 = vsel %vm348, %v920, 0.0
  %v940 = vadd.f32 %v938, %v939
  %v941 = vsel %vm348, %v923, 0.0
  %v942 = vadd.f32 %v940, %v941
  %v943 = vrot.slane %v942, 4
  %v944 = vadd.f32 %v942, %v943
  %v945 = vrot.slane %v944, 2
  %v946 = vadd.f32 %v944, %v945
  %v947 = vrot.slane %v946, 1
  %v948 = vadd.f32 %v946, %v947
  %v949 = vmul.f32 %v948, %v538
  %v950 = vsub.f32 %v896, %v949
  %v951 = vsub.f32 %v899, %v949
  %v952 = vsub.f32 %v904, %v949
  %v953 = vsub.f32 %v907, %v949
  %v954 = vsub.f32 %v912, %v949
  %v955 = vsub.f32 %v915, %v949
  %v956 = vsub.f32 %v920, %v949
  %v957 = vsub.f32 %v923, %v949
  %v958 = vmul.f32 %v950, %v950
  %v959 = vmul.f32 %v951, %v951
  %v960 = vmul.f32 %v952, %v952
  %v961 = vmul.f32 %v953, %v953
  %v962 = vmul.f32 %v954, %v954
  %v963 = vmul.f32 %v955, %v955
  %v964 = vmul.f32 %v956, %v956
  %v965 = vmul.f32 %v957, %v957
  %v966 = vsel %vm348, %v958, 0.0
  %v967 = vsel %vm348, %v959, 0.0
  %v968 = vadd.f32 %v966, %v967
  %v969 = vsel %vm348, %v960, 0.0
  %v970 = vadd.f32 %v968, %v969
  %v971 = vsel %vm348, %v961, 0.0
  %v972 = vadd.f32 %v970, %v971
  %v973 = vsel %vm348, %v962, 0.0
  %v974 = vadd.f32 %v972, %v973
  %v975 = vsel %vm348, %v963, 0.0
  %v976 = vadd.f32 %v974, %v975
  %v977 = vsel %vm348, %v964, 0.0
  %v978 = vadd.f32 %v976, %v977
  %v979 = vsel %vm348, %v965, 0.0
  %v980 = vadd.f32 %v978, %v979
  %v981 = vrot.slane %v980, 4
  %v982 = vadd.f32 %v980, %v981
  %v983 = vrot.slane %v982, 2
  %v984 = vadd.f32 %v982, %v983
  %v985 = vrot.slane %v984, 1
  %v986 = vadd.f32 %v984, %v985
  %v987 = vmul.f32 %v986, %v538
  %v988 = vadd.f32 %v987, 1e-05
  %v989 = vrsqrt.pop %v988
  %v990 = vmul.f32 %v950, %v989
  %v991 = vmul.f32 %v951, %v989
  %v992 = vmul.f32 %v952, %v989
  %v993 = vmul.f32 %v953, %v989
  %v994 = vmul.f32 %v954, %v989
  %v995 = vmul.f32 %v955, %v989
  %v996 = vmul.f32 %v956, %v989
  %v997 = vmul.f32 %v957, %v989
  %v999 = vlaneseq
  %v1000 = vshrl.u32 %v999, 7
  %v1001 = vsub.s32 0, %v1000
  %v1002 = vrot.slane %v926, %v1001
  %v1004 = vmul.f32 %v1002, %v990
  %v1005 = vmul.f32 %v1002, %v991
  %v1006 = vmul.f32 %v1002, %v992
  %v1007 = vmul.f32 %v1002, %v993
  %v1008 = vmul.f32 %v1002, %v994
  %v1009 = vmul.f32 %v1002, %v995
  %v1010 = vmul.f32 %v1002, %v996
  %v1011 = vmul.f32 %v1002, %v997
  %v1013 = vlaneseq
  %v1014 = vshrl.u32 %v1013, 7
  %v1015 = vsub.s32 0, %v1014
  %v1016 = vrot.slane %v927, %v1015
  %v1018 = vadd.f32 %v1004, %v1016
  %v1019 = vadd.f32 %v1005, %v1016
  %v1020 = vadd.f32 %v1006, %v1016
  %v1021 = vadd.f32 %v1007, %v1016
  %v1022 = vadd.f32 %v1008, %v1016
  %v1023 = vadd.f32 %v1009, %v1016
  %v1024 = vadd.f32 %v1010, %v1016
  %v1025 = vadd.f32 %v1011, %v1016
  %v1026 = vmax.f32 %v1018, 0.0
  %v1027 = vmax.f32 %v1019, 0.0
  %v1028 = vmax.f32 %v1020, 0.0
  %v1029 = vmax.f32 %v1021, 0.0
  %v1030 = vmax.f32 %v1022, 0.0
  %v1031 = vmax.f32 %v1023, 0.0
  %v1032 = vmax.f32 %v1024, 0.0
  %v1033 = vmax.f32 %v1025, 0.0
  %v1034 = vpack.c.bf16 %v1027, %v1026
  %v1035 = vpack.c.bf16 %v1029, %v1028
  %v1036 = vpack.c.bf16 %v1031, %v1030
  %v1037 = vpack.c.bf16 %v1033, %v1032
  %v1039 = vshrl.u32 %v1034, 16
  %v1041 = vrot.slane %v1039, 7
  %v1042 = vshll.u32 %v1034, 16
  %v1044 = vor.u32 %v1041, %v1042
  %v1046 = vshrl.u32 %v1035, 16
  %v1048 = vrot.slane %v1046, 7
  %v1049 = vshll.u32 %v1035, 16
  %v1051 = vor.u32 %v1048, %v1049
  %v1053 = vshrl.u32 %v1036, 16
  %v1055 = vrot.slane %v1053, 7
  %v1056 = vshll.u32 %v1036, 16
  %v1058 = vor.u32 %v1055, %v1056
  %v1060 = vshrl.u32 %v1037, 16
  %v1062 = vrot.slane %v1060, 7
  %v1063 = vshll.u32 %v1037, 16
  %v1065 = vor.u32 %v1062, %v1063
  %vm1074 = vcmask 1040384
  %vm1075 = vsmask.f32 256
  %vm1076 = vmand %vm1074, %vm1075
  %v1077 = vsel %vm1076, 0, %v1044
  %v1078 = vsel %vm1076, 0, %v1051
  %v1079 = vsel %vm1076, 0, %v1058
  %v1080 = vsel %vm1076, 0, %v1065
  %v1081 = vsel %vm1076, %v1041, 0
  %v1082 = vsel %vm1076, %v1048, 0
  %v1083 = vsel %vm1076, %v1055, 0
  %v1084 = vsel %vm1076, %v1062, 0
  %v1086 = vshrl.u32 %v1077, 16
  %v1088 = vshll.u32 %v1077, 16
  %v1090 = vrot.slane %v1088, 1
  %v1091 = vor.u32 %v1086, %v1090
  %v1093 = vshll.u32 %v1081, 16
  %v1095 = vrot.slane %v1093, 1
  %v1096 = vsel %vm79, %v1091, %v1095
  %v1098 = vshrl.u32 %v1078, 16
  %v1100 = vshll.u32 %v1078, 16
  %v1102 = vrot.slane %v1100, 1
  %v1103 = vor.u32 %v1098, %v1102
  %v1105 = vshll.u32 %v1082, 16
  %v1107 = vrot.slane %v1105, 1
  %v1108 = vsel %vm79, %v1103, %v1107
  %v1110 = vshrl.u32 %v1079, 16
  %v1112 = vshll.u32 %v1079, 16
  %v1114 = vrot.slane %v1112, 1
  %v1115 = vor.u32 %v1110, %v1114
  %v1117 = vshll.u32 %v1083, 16
  %v1119 = vrot.slane %v1117, 1
  %v1120 = vsel %vm79, %v1115, %v1119
  %v1122 = vshrl.u32 %v1080, 16
  %v1124 = vshll.u32 %v1080, 16
  %v1126 = vrot.slane %v1124, 1
  %v1127 = vor.u32 %v1122, %v1126
  %v1129 = vshll.u32 %v1084, 16
  %v1131 = vrot.slane %v1129, 1
  %v1132 = vsel %vm79, %v1127, %v1131
  %1133 = vrot.lane.b32.xlu0 %v1096, 8
  %v1134 = vpop.permute.xlu0 %1133
  %1135 = vrot.lane.b32.xlu0 %v1108, 8
  %v1136 = vpop.permute.xlu0 %1135
  %1137 = vrot.lane.b32.xlu0 %v1120, 8
  %v1138 = vpop.permute.xlu0 %1137
  %1139 = vrot.lane.b32.xlu0 %v1132, 8
  %v1140 = vpop.permute.xlu0 %1139
  %v1149 = vrot.slane %v1077, 1
  %v1150 = vrot.slane %v1081, 1
  %v1151 = vsel %vm136, %v1149, %v1150
  %v1152 = vrot.slane %v1078, 1
  %v1153 = vrot.slane %v1082, 1
  %v1154 = vsel %vm136, %v1152, %v1153
  %v1155 = vrot.slane %v1079, 1
  %v1156 = vrot.slane %v1083, 1
  %v1157 = vsel %vm136, %v1155, %v1156
  %v1158 = vrot.slane %v1080, 1
  %v1159 = vrot.slane %v1084, 1
  %v1160 = vsel %vm136, %v1158, %v1159
  %1161 = vrot.lane.b32.xlu0 %v1151, 16
  %v1162 = vpop.permute.xlu0 %1161
  %1163 = vrot.lane.b32.xlu0 %v1154, 16
  %v1164 = vpop.permute.xlu0 %1163
  %1165 = vrot.lane.b32.xlu0 %v1157, 16
  %v1166 = vpop.permute.xlu0 %1165
  %1167 = vrot.lane.b32.xlu0 %v1160, 16
  %v1168 = vpop.permute.xlu0 %1167
  %v1170 = vsel %vm348, %v1077, %v1134
  %v1172 = vsel %vm348, %v1078, %v1136
  %v1174 = vsel %vm348, %v1079, %v1138
  %v1176 = vsel %vm348, %v1080, %v1140
  %v1178 = vsel %vm366, %v1170, %v1162
  %v1180 = vsel %vm366, %v1172, %v1164
  %v1182 = vsel %vm366, %v1174, %v1166
  %v1184 = vsel %vm366, %v1176, %v1168
  %v1185 = vld [vmem:[%s9] sm:$0xf]
  %v1186 = vld [vmem:[%s9 + $0x4] sm:$0xf]
  %v1187 = vld [vmem:[%s9 + $0x8] sm:$0xf]
  %v1188 = vld [vmem:[%s10] sm:$0x1]
  %v1190 = vlaneseq
  %v1191 = vshrl.u32 %v1190, 7
  %v1192 = vsub.s32 0, %v1191
  %v1193 = vrot.slane %v1188, %v1192
  %v1198 = vunpack.c.l.b16 %v1185
  %v1199 = vunpack.c.l.b16 %v1186
  %v1200 = vunpack.c.l.b16 %v1187
  %v1201 = vpack.c.b16 %v1199, %v1198
  %v1202 = vpack.c.b16 %v1200, %v1200
  %v1204 = vsel %vm384, %v1178, 0
  %v1206 = vsel %vm384, %v1180, 0
  %v1208 = vsel %vm384, %v1182, 0
  %v1210 = vsel %vm384, %v1184, 0
  %v1213 = vsel %vm857, %v1202, 0
  %1215 = vmatprep.subr.bf16.mxu0 0
  %1216 = vmatpush1.bf16.msra.mxu0 %v1201
  %1217 = vmatprep.subr.bf16.mxu0 0
  %1218 = vmatpush1.bf16.msra.mxu0 %v1213
  %1219 = vmatprep.subr.bf16.mxu0 0
  %1220 = vmatpush1.bf16.msra.mxu0 0
  %1221 = vmatprep.subr.bf16.mxu0 0
  %1222 = vmatpush1.bf16.msra.mxu0 0
  %1223 = vmatprep.subr.bf16.mxu0 0
  %1224 = vmatpush1.bf16.msra.mxu0 0
  %1225 = vmatprep.subr.bf16.mxu0 0
  %1226 = vmatpush1.bf16.msra.mxu0 0
  %1227 = vmatprep.subr.bf16.mxu0 0
  %1228 = vmatpush1.bf16.msra.mxu0 0
  %1229 = vmatprep.subr.bf16.mxu0 0
  %1230 = vmatpush1.bf16.msra.mxu0 0
  %1231 = vmatprep.subr.bf16.mxu0 0
  %1232 = vmatpush1.bf16.msra.mxu0 0
  %1233 = vmatprep.subr.bf16.mxu0 0
  %1234 = vmatpush1.bf16.msra.mxu0 0
  %1235 = vmatprep.subr.bf16.mxu0 0
  %1236 = vmatpush1.bf16.msra.mxu0 0
  %1237 = vmatprep.subr.bf16.mxu0 0
  %1238 = vmatpush1.bf16.msra.mxu0 0
  %1239 = vmatprep.subr.bf16.mxu0 0
  %1240 = vmatpush1.bf16.msra.mxu0 0
  %1241 = vmatprep.subr.bf16.mxu0 0
  %1242 = vmatpush1.bf16.msra.mxu0 0
  %1243 = vmatprep.subr.bf16.mxu0 0
  %1244 = vmatpush1.bf16.msra.mxu0 0
  %1245 = vmatprep.subr.bf16.mxu0 0
  %1246 = vmatpush1.bf16.msra.mxu0 0
  %1247 = vmatprep.mubr.bf16.mxu0 0
  %1248 = vmatmul.mubr.bf16.gmra.mrb[0].mxu0 %v1204
  %v1249 = vpop.f32.mrb[0].mxu0
  %v1250 = vadd.f32 %v1193, %v1249
  %v1251 = vpop.f32.mrb[0].mxu0
  %v1252 = vpop.f32.mrb[0].mxu0
  %v1253 = vadd.f32 %v1193, %v1252
  %v1254 = vpop.f32.mrb[0].mxu0
  %1255 = vmatprep.mubr.bf16.mxu0 0
  %1256 = vmatmul.mubr.bf16.gmra.mrb[0].mxu0 %v1206
  %v1257 = vpop.f32.mrb[0].mxu0
  %v1258 = vadd.f32 %v1193, %v1257
  %v1259 = vpop.f32.mrb[0].mxu0
  %v1260 = vpop.f32.mrb[0].mxu0
  %v1261 = vadd.f32 %v1193, %v1260
  %v1262 = vpop.f32.mrb[0].mxu0
  %1263 = vmatprep.mubr.bf16.mxu0 0
  %1264 = vmatmul.mubr.bf16.gmra.mrb[0].mxu0 %v1208
  %v1265 = vpop.f32.mrb[0].mxu0
  %v1266 = vadd.f32 %v1193, %v1265
  %v1267 = vpop.f32.mrb[0].mxu0
  %v1268 = vpop.f32.mrb[0].mxu0
  %v1269 = vadd.f32 %v1193, %v1268
  %v1270 = vpop.f32.mrb[0].mxu0
  %1271 = vmatprep.mubr.bf16.mxu0 0
  %1272 = vmatmul.mubr.bf16.gmra.mrb[0].mxu0 %v1210
  %v1273 = vpop.f32.mrb[0].mxu0
  %v1274 = vadd.f32 %v1193, %v1273
  %v1275 = vpop.f32.mrb[0].mxu0
  %v1276 = vpop.f32.mrb[0].mxu0
  %v1277 = vadd.f32 %v1193, %v1276
  %v1278 = vpop.f32.mrb[0].mxu0
  %1279 = vdwg.mxu0
  %v1280 = vld [vmem:[%s11] sm:$0x1]
  %v1281 = vld [vmem:[%s12] sm:$0x1]
  %v1282 = vsel %vm348, %v1250, 0.0
  %v1283 = vsel %vm348, %v1253, 0.0
  %v1284 = vadd.f32 %v1282, %v1283
  %v1285 = vsel %vm348, %v1258, 0.0
  %v1286 = vadd.f32 %v1284, %v1285
  %v1287 = vsel %vm348, %v1261, 0.0
  %v1288 = vadd.f32 %v1286, %v1287
  %v1289 = vsel %vm348, %v1266, 0.0
  %v1290 = vadd.f32 %v1288, %v1289
  %v1291 = vsel %vm348, %v1269, 0.0
  %v1292 = vadd.f32 %v1290, %v1291
  %v1293 = vsel %vm348, %v1274, 0.0
  %v1294 = vadd.f32 %v1292, %v1293
  %v1295 = vsel %vm348, %v1277, 0.0
  %v1296 = vadd.f32 %v1294, %v1295
  %v1297 = vrot.slane %v1296, 4
  %v1298 = vadd.f32 %v1296, %v1297
  %v1299 = vrot.slane %v1298, 2
  %v1300 = vadd.f32 %v1298, %v1299
  %v1301 = vrot.slane %v1300, 1
  %v1302 = vadd.f32 %v1300, %v1301
  %v1303 = vmul.f32 %v1302, %v538
  %v1304 = vsub.f32 %v1250, %v1303
  %v1305 = vsub.f32 %v1253, %v1303
  %v1306 = vsub.f32 %v1258, %v1303
  %v1307 = vsub.f32 %v1261, %v1303
  %v1308 = vsub.f32 %v1266, %v1303
  %v1309 = vsub.f32 %v1269, %v1303
  %v1310 = vsub.f32 %v1274, %v1303
  %v1311 = vsub.f32 %v1277, %v1303
  %v1312 = vmul.f32 %v1304, %v1304
  %v1313 = vmul.f32 %v1305, %v1305
  %v1314 = vmul.f32 %v1306, %v1306
  %v1315 = vmul.f32 %v1307, %v1307
  %v1316 = vmul.f32 %v1308, %v1308
  %v1317 = vmul.f32 %v1309, %v1309
  %v1318 = vmul.f32 %v1310, %v1310
  %v1319 = vmul.f32 %v1311, %v1311
  %v1320 = vsel %vm348, %v1312, 0.0
  %v1321 = vsel %vm348, %v1313, 0.0
  %v1322 = vadd.f32 %v1320, %v1321
  %v1323 = vsel %vm348, %v1314, 0.0
  %v1324 = vadd.f32 %v1322, %v1323
  %v1325 = vsel %vm348, %v1315, 0.0
  %v1326 = vadd.f32 %v1324, %v1325
  %v1327 = vsel %vm348, %v1316, 0.0
  %v1328 = vadd.f32 %v1326, %v1327
  %v1329 = vsel %vm348, %v1317, 0.0
  %v1330 = vadd.f32 %v1328, %v1329
  %v1331 = vsel %vm348, %v1318, 0.0
  %v1332 = vadd.f32 %v1330, %v1331
  %v1333 = vsel %vm348, %v1319, 0.0
  %v1334 = vadd.f32 %v1332, %v1333
  %v1335 = vrot.slane %v1334, 4
  %v1336 = vadd.f32 %v1334, %v1335
  %v1337 = vrot.slane %v1336, 2
  %v1338 = vadd.f32 %v1336, %v1337
  %v1339 = vrot.slane %v1338, 1
  %v1340 = vadd.f32 %v1338, %v1339
  %v1341 = vmul.f32 %v1340, %v538
  %v1342 = vadd.f32 %v1341, 1e-05
  %v1343 = vrsqrt.pop %v1342
  %v1344 = vmul.f32 %v1304, %v1343
  %v1345 = vmul.f32 %v1305, %v1343
  %v1346 = vmul.f32 %v1306, %v1343
  %v1347 = vmul.f32 %v1307, %v1343
  %v1348 = vmul.f32 %v1308, %v1343
  %v1349 = vmul.f32 %v1309, %v1343
  %v1350 = vmul.f32 %v1310, %v1343
  %v1351 = vmul.f32 %v1311, %v1343
  %v1353 = vlaneseq
  %v1354 = vshrl.u32 %v1353, 7
  %v1355 = vsub.s32 0, %v1354
  %v1356 = vrot.slane %v1280, %v1355
  %v1358 = vmul.f32 %v1356, %v1344
  %v1359 = vmul.f32 %v1356, %v1345
  %v1360 = vmul.f32 %v1356, %v1346
  %v1361 = vmul.f32 %v1356, %v1347
  %v1362 = vmul.f32 %v1356, %v1348
  %v1363 = vmul.f32 %v1356, %v1349
  %v1364 = vmul.f32 %v1356, %v1350
  %v1365 = vmul.f32 %v1356, %v1351
  %v1367 = vlaneseq
  %v1368 = vshrl.u32 %v1367, 7
  %v1369 = vsub.s32 0, %v1368
  %v1370 = vrot.slane %v1281, %v1369
  %v1372 = vadd.f32 %v1358, %v1370
  %v1373 = vadd.f32 %v1359, %v1370
  %v1374 = vadd.f32 %v1360, %v1370
  %v1375 = vadd.f32 %v1361, %v1370
  %v1376 = vadd.f32 %v1362, %v1370
  %v1377 = vadd.f32 %v1363, %v1370
  %v1378 = vadd.f32 %v1364, %v1370
  %v1379 = vadd.f32 %v1365, %v1370
  %v1380 = vmax.f32 %v1372, 0.0
  %v1381 = vmax.f32 %v1373, 0.0
  %v1382 = vmax.f32 %v1374, 0.0
  %v1383 = vmax.f32 %v1375, 0.0
  %v1384 = vmax.f32 %v1376, 0.0
  %v1385 = vmax.f32 %v1377, 0.0
  %v1386 = vmax.f32 %v1378, 0.0
  %v1387 = vmax.f32 %v1379, 0.0
  %1396 = vrot.lane.b32.xlu0 %v608, 120
  %v1397 = vpop.permute.xlu0 %1396
  %1398 = vrot.lane.b32.xlu0 %v609, 120
  %v1399 = vpop.permute.xlu0 %1398
  %1400 = vrot.lane.b32.xlu0 %v610, 120
  %v1401 = vpop.permute.xlu0 %1400
  %1402 = vrot.lane.b32.xlu0 %v611, 120
  %v1403 = vpop.permute.xlu0 %1402
  %1404 = vrot.lane.b32.xlu0 %v612, 120
  %v1405 = vpop.permute.xlu0 %1404
  %1406 = vrot.lane.b32.xlu0 %v613, 120
  %v1407 = vpop.permute.xlu0 %1406
  %1408 = vrot.lane.b32.xlu0 %v614, 120
  %v1409 = vpop.permute.xlu0 %1408
  %1410 = vrot.lane.b32.xlu0 %v615, 120
  %v1411 = vpop.permute.xlu0 %1410
  %v1420 = vadd.f32 %v1380, %v1397
  %v1421 = vadd.f32 %v1381, %v1399
  %v1422 = vadd.f32 %v1382, %v1401
  %v1423 = vadd.f32 %v1383, %v1403
  %v1424 = vadd.f32 %v1384, %v1405
  %v1425 = vadd.f32 %v1385, %v1407
  %v1426 = vadd.f32 %v1386, %v1409
  %v1427 = vadd.f32 %v1387, %v1411
  %1428 = vst.msk [vmem:[%s13] sm:$0xff] %vm348, %v1420
  %1429 = vst.msk [vmem:[%s13 + $0x8] sm:$0xff] %vm348, %v1421
  %1430 = vst.msk [vmem:[%s13 + $0x10] sm:$0xff] %vm348, %v1422
  %1431 = vst.msk [vmem:[%s13 + $0x18] sm:$0xff] %vm348, %v1423
  %1432 = vst.msk [vmem:[%s13 + $0x20] sm:$0xff] %vm348, %v1424
  %1433 = vst.msk [vmem:[%s13 + $0x28] sm:$0xff] %vm348, %v1425
  %1434 = vst.msk [vmem:[%s13 + $0x30] sm:$0xff] %vm348, %v1426
  %1435 = vst.msk [vmem:[%s13 + $0x38] sm:$0xff] %vm348, %v1427
  // Predicated region
  $region54: #{tpu_custom_call.1} parent=0 // pred_check
    _
  $region55: #{tpu_custom_call.1} parent=0 // pred_check_branch
    %1437 = sbr.rel (0) target = $region57
  $region56: #{tpu_custom_call.1} parent=0 // pred_region
    _
  $region57: #{tpu_custom_call.1} parent=0 // pred_fallthru
    _
  // Predicated region
  $region58: #{tpu_custom_call.1} parent=0 // pred_check
    _
  $region59: #{tpu_custom_call.1} parent=0 // pred_check_branch
    %1439 = sbr.rel (0) target = $region61
  $region60: #{tpu_custom_call.1} parent=0 // pred_region
    _
  $region61: #{tpu_custom_call.1} parent=0 // pred_fallthru
    _

</llo_original>
